<compile_context>
chip_gen: v6e
topology: v6e:2x2x1
jax: 0.10.0
libtpu: 0.0.40
codegen_flags: <defaults>
</compile_context>

<pallas_src>
import jax
import jax.numpy as jnp
from jax import lax
from jax.experimental import pallas as pl
from jax.experimental.pallas import tpu as pltpu


# --------------------------------------------------------------------------
# Kernel 1: batched tanh recurrence over time chunks.
#   h_t = tanh(xp_t + h_{t-1} @ W_hh),  xp_t = x_t @ W_ih + b_ih + b_hh
# --------------------------------------------------------------------------
def rnn_recurrence_kernel(xp_ref,     # VMEM (T_CHUNK, B, H) f32  pre-projected inputs
                          w_hh_ref,   # VMEM (H, H)          bf16
                          len_ref,    # VMEM (B, 1)          int32
                          hs_ref,     # VMEM (T_CHUNK, B, H) f32  masked hidden states (out)
                          h_scr):     # VMEM (B, H)          f32  hidden-state carry
    c = pl.program_id(0)
    t_chunk = xp_ref.shape[0]

    @pl.when(c == 0)
    def _():
        h_scr[...] = jnp.zeros_like(h_scr)

    # pad_packed_sequence semantics: outputs at t >= lengths[b] must be zero.
    hs_ref[...] = jnp.zeros_like(hs_ref)

    lens = len_ref[...]                      # (B, 1) int32
    w_hh = w_hh_ref[...]                     # (H, H) bf16
    chunk_start = c * t_chunk
    max_len = jnp.max(lens)
    # Skip all compute beyond the longest sequence in the batch.
    t_hi = jnp.clip(max_len - chunk_start, 0, t_chunk)

    def body(t, h):
        x = xp_ref[t]                                              # (B, H) f32
        h = jnp.tanh(
            x + jnp.dot(h.astype(jnp.bfloat16), w_hh,
                        preferred_element_type=jnp.float32))
        mask = ((chunk_start + t) < lens).astype(jnp.float32)      # (B, 1)
        hs_ref[t] = h * mask
        return h

    h_scr[...] = lax.fori_loop(0, t_hi, body, h_scr[...])


# --------------------------------------------------------------------------
# Kernel 2: lane-dense tiled linear head  logits = hs @ W_out + b_out
# --------------------------------------------------------------------------
def head_kernel(hs_ref, w_out_ref, b_out_ref, out_ref):
    out_ref[...] = (
        jnp.dot(hs_ref[...].astype(jnp.bfloat16), w_out_ref[...],
                preferred_element_type=jnp.float32)
        + b_out_ref[...]
    )


# --------------------------------------------------------------------------
# Wrapper
# --------------------------------------------------------------------------
def _pick_tile(dim, pref, align):
    """Full extent if small/unaligned, else a multiple of `align` dividing dim."""
    if dim <= pref or dim % align:
        return dim
    t = pref - (pref % align)
    t = t if t else align
    while dim % t:
        t -= align
    return t


def _vmem_limit(working_bytes):
    # Generous headroom, but below v7x's 64 MiB physical VMEM per TensorCore.
    return int(min(max(4 * working_bytes, 32 * 2**20), 48 * 2**20))


def language_model_forward(indices, lengths, params, max_len=None):
    """indices: (B, T) int32, lengths: (B,) int32 -> logits (B, max_len, V)."""
    emb_table, w_ih, w_hh, b_ih, b_hh, w_out, b_out = params
    B, T = indices.shape
    H = w_hh.shape[0]
    V = w_out.shape[1]

    # ---- XLA glue: embedding gather fused with the input projection ----
    embeds = jnp.take(emb_table, indices, axis=0).astype(jnp.float32)    # (B,T,E)
    xp = jnp.einsum('bte,eh->bth', embeds, w_ih) + (b_ih + b_hh)          # (B,T,H)
    xp_tbh = jnp.transpose(xp, (1, 0, 2))                                 # (T,B,H)
    lens2d = lengths.astype(jnp.int32).reshape(B, 1)

    # ---- Pallas kernel 1: batched tanh recurrence over time chunks ----
    t_chunk = T if T <= 128 else 128
    n_chunks = pl.cdiv(T, t_chunk)
    rec_working = (2 * t_chunk * B * H * 4) * 2 + H * H * 2 + B * 4 + B * H * 4
    hs = pl.pallas_call(
        rnn_recurrence_kernel,
        out_shape=jax.ShapeDtypeStruct((T, B, H), jnp.float32),
        grid=(n_chunks,),
        in_specs=[
            pl.BlockSpec((t_chunk, B, H), lambda c: (c, 0, 0)),
            pl.BlockSpec((H, H), lambda c: (0, 0)),
            pl.BlockSpec((B, 1), lambda c: (0, 0)),
        ],
        out_specs=pl.BlockSpec((t_chunk, B, H), lambda c: (c, 0, 0)),
        scratch_shapes=[pltpu.VMEM((B, H), jnp.float32)],
        compiler_params=pltpu.CompilerParams(
            dimension_semantics=("arbitrary",),   # hidden state carried across chunks
            vmem_limit_bytes=_vmem_limit(rec_working)),
        cost_estimate=pl.CostEstimate(
            flops=2 * T * B * H * H,
            transcendentals=T * B * H,
            bytes_accessed=2 * T * B * H * 4 + H * H * 2 + B * 4),
    )(xp_tbh, w_hh.astype(jnp.bfloat16), lens2d)

    # ---- Pallas kernel 2: tiled linear head over (M, V) ----
    M = T * B
    hs_flat = hs.reshape(M, H)
    tile_m = _pick_tile(M, 256, 8)
    tile_v = _pick_tile(V, 512, 128)
    head_working = (tile_m * H * 4 + H * tile_v * 2 + tile_v * 4
                    + tile_m * tile_v * 4) * 2
    logits_flat = pl.pallas_call(
        head_kernel,
        out_shape=jax.ShapeDtypeStruct((M, V), jnp.float32),
        grid=(M // tile_m, V // tile_v),
        in_specs=[
            pl.BlockSpec((tile_m, H), lambda i, j: (i, 0)),
            pl.BlockSpec((H, tile_v), lambda i, j: (0, j)),
            pl.BlockSpec((1, tile_v), lambda i, j: (0, j)),
        ],
        out_specs=pl.BlockSpec((tile_m, tile_v), lambda i, j: (i, j)),
        compiler_params=pltpu.CompilerParams(
            dimension_semantics=("parallel", "parallel"),
            vmem_limit_bytes=_vmem_limit(head_working)),
        cost_estimate=pl.CostEstimate(
            flops=2 * M * H * V,
            transcendentals=0,
            bytes_accessed=M * H * 4 + H * V * 2 + V * 4 + M * V * 4),
    )(hs_flat, w_out.astype(jnp.bfloat16), b_out.reshape(1, V))

    logits = jnp.transpose(logits_flat.reshape(T, B, V), (1, 0, 2))       # (B,T,V)

    # pad_packed_sequence truncates the time axis to max(lengths); that value
    # is data-dependent, so pass a static max_len under jit (here derived on
    # the host when not provided).
    if max_len is None:
        max_len = int(jax.device_get(jnp.max(lengths)))   # only valid outside jit
    return logits[:, :max_len, :]


def init_params(key, vocab_size, embed_size, hidden_size, pad_id=0):
    """Deterministic init mirroring PyTorch defaults (shapes are what matter)."""
    k_emb, k1, k2, k3, k4, k5, k6 = jax.random.split(key, 7)
    emb = jax.random.normal(k_emb, (vocab_size, embed_size), jnp.float32)
    emb = emb.at[pad_id].set(0.0)                      # nn.Embedding padding_idx
    s = 1.0 / jnp.sqrt(hidden_size)
    w_ih = jax.random.uniform(k1, (embed_size, hidden_size), jnp.float32, -s, s)
    w_hh = jax.random.uniform(k2, (hidden_size, hidden_size), jnp.float32, -s, s)
    b_ih = jax.random.uniform(k3, (hidden_size,), jnp.float32, -s, s)
    b_hh = jax.random.uniform(k4, (hidden_size,), jnp.float32, -s, s)
    w_out = jax.random.uniform(k5, (hidden_size, vocab_size), jnp.float32, -s, s)
    b_out = jax.random.uniform(k6, (vocab_size,), jnp.float32, -s, s)
    return (emb, w_ih, w_hh, b_ih, b_hh, w_out, b_out)


if __name__ == "__main__":
    # Small shapes consistent with the module's forward.
    B, T = 2, 8
    VOCAB, EMBED, HIDDEN = 32, 32, 32
    PAD_ID = 0

    key = jax.random.PRNGKey(0)
    k_params, k_idx = jax.random.split(key)
    params = init_params(k_params, VOCAB, EMBED, HIDDEN, pad_id=PAD_ID)

    lengths = jnp.array([8, 5], dtype=jnp.int32)
    indices = jax.random.randint(k_idx, (B, T), 1, VOCAB, dtype=jnp.int32)
    # Positions beyond each sequence's length hold the pad token.
    t_pos = jnp.arange(T)[None, :]
    indices = jnp.where(t_pos < lengths[:, None], indices, PAD_ID)

    max_len = 8  # static max(lengths); data-dependent truncation done host-side
    logits = language_model_forward(indices, lengths, params, max_len=max_len)
    jax.block_until_ready(logits)

    assert logits.shape == (B, max_len, VOCAB)
    # TODO(synk): the autoregressive `inference()` sampling loop is not implemented
    # (only the training-time forward pass).
    print("KERNEL_OK")
</pallas_src>

<mosaic_0001>
module attributes {stable_mosaic.version = 11 : i64} {
  func.func @rnn_recurrence_kernel(%arg0: i32, %arg1: memref<8x2x32xf32, #tpu.memory_space<vmem>>, %arg2: memref<32x32xbf16, #tpu.memory_space<vmem>>, %arg3: memref<2x1xi32, #tpu.memory_space<vmem>>, %arg4: memref<8x2x32xf32, #tpu.memory_space<vmem>>, %arg5: memref<2x32xf32, #tpu.memory_space<vmem>>) attributes {dimension_semantics = [#tpu.dimension_semantics<arbitrary>], iteration_bounds = array<i64: 1>, scalar_prefetch = 0 : i64, scratch_operands = 1 : i64, tpu.core_type = #tpu.core_type<tc>, window_params = [{transform_indices = @transform_0, window_bounds = array<i64: 8, 2, 32>}, {pipeline_mode = #tpu.pipeline_mode<synchronous>, transform_indices = @transform_1, window_bounds = array<i64: 32, 32>}, {pipeline_mode = #tpu.pipeline_mode<synchronous>, transform_indices = @transform_2, window_bounds = array<i64: 2, 1>}, {transform_indices = @transform_3, window_bounds = array<i64: 8, 2, 32>}]} {
    %c0_i32 = arith.constant 0 : i32
    %0 = arith.cmpi eq, %arg0, %c0_i32 : i32
    %1 = arith.extui %0 : i1 to i32
    %c0_i32_0 = arith.constant 0 : i32
    %2 = arith.cmpi ne, %1, %c0_i32_0 : i32
    scf.if %2 {
      %cst_15 = arith.constant 0.000000e+00 : f32
      %20 = vector.broadcast %cst_15 : f32 to vector<2x32xf32>
      %c0_16 = arith.constant 0 : index
      %c0_17 = arith.constant 0 : index
      %21 = vector.load %arg5[%c0_16, %c0_17] : memref<2x32xf32, #tpu.memory_space<vmem>>, vector<2x32xf32>
      tpu.vector_store %arg5[%c0_16, %c0_17], %20 {strides = array<i32>} : memref<2x32xf32, #tpu.memory_space<vmem>>, vector<2x32xf32>,
    } else {
    }
    %cst = arith.constant 0.000000e+00 : f32
    %3 = vector.broadcast %cst : f32 to vector<8x2x32xf32>
    %c0 = arith.constant 0 : index
    %c0_1 = arith.constant 0 : index
    %c0_2 = arith.constant 0 : index
    %4 = vector.load %arg4[%c0, %c0_1, %c0_2] : memref<8x2x32xf32, #tpu.memory_space<vmem>>, vector<8x2x32xf32>
    tpu.vector_store %arg4[%c0, %c0_1, %c0_2], %3 {strides = array<i32>} : memref<8x2x32xf32, #tpu.memory_space<vmem>>, vector<8x2x32xf32>,
    %c0_3 = arith.constant 0 : index
    %c0_4 = arith.constant 0 : index
    %5 = vector.load %arg3[%c0_3, %c0_4] : memref<2x1xi32, #tpu.memory_space<vmem>>, vector<2x1xi32>
    %c0_5 = arith.constant 0 : index
    %c0_6 = arith.constant 0 : index
    %6 = vector.load %arg2[%c0_5, %c0_6] : memref<32x32xbf16, #tpu.memory_space<vmem>>, vector<32x32xbf16>
    %c8_i32 = arith.constant 8 : i32
    %7 = arith.muli %arg0, %c8_i32 : i32
    %8 = vector.shape_cast %5 : vector<2x1xi32> to vector<1x2x1xi32>
    %cst_7 = arith.constant dense<-2147483648> : vector<1xi32>
    %9 = vector.multi_reduction <maxsi>, %8, %cst_7 [1, 2] : vector<1x2x1xi32> to vector<1xi32>
    %10 = vector.shape_cast %9 : vector<1xi32> to vector<1x1x1xi32>
    %11 = vector.extract %10[0, 0, 0] : i32 from vector<1x1x1xi32>
    %12 = arith.subi %11, %7 : i32
    %c0_i32_8 = arith.constant 0 : i32
    %c8_i32_9 = arith.constant 8 : i32
    %13 = arith.maxsi %c0_i32_8, %12 : i32
    %14 = arith.minsi %c8_i32_9, %13 : i32
    %c0_10 = arith.constant 0 : index
    %c0_11 = arith.constant 0 : index
    %15 = vector.load %arg5[%c0_10, %c0_11] : memref<2x32xf32, #tpu.memory_space<vmem>>, vector<2x32xf32>
    %c0_i32_12 = arith.constant 0 : i32
    %16 = arith.subi %14, %c0_i32_12 : i32
    %17 = arith.addi %c0_i32_12, %16 : i32
    %c1_i32 = arith.constant 1 : i32
    %18 = scf.for %arg6 = %c0_i32_12 to %17 step %c1_i32 iter_args(%arg7 = %15) -> (vector<2x32xf32>)  : i32 {
      %20 = arith.index_cast %arg6 : i32 to index
      %c0_15 = arith.constant 0 : index
      %c0_16 = arith.constant 0 : index
      %21 = vector.load %arg1[%20, %c0_15, %c0_16] : memref<8x2x32xf32, #tpu.memory_space<vmem>>, vector<1x2x32xf32>
      %22 = vector.shape_cast %21 : vector<1x2x32xf32> to vector<2x32xf32>
      %23 = arith.truncf %arg7 : vector<2x32xf32> to vector<2x32xbf16>
      %cst_17 = arith.constant dense<0.000000e+00> : vector<2x32xf32>
      %24 = tpu.matmul %23, %6, %cst_17 {dimension_numbers = #tpu.dot_dimension_numbers<[1], [0], [0], [1], [0, 0, 1, 1], [], []>} : vector<2x32xbf16>, vector<32x32xbf16>, vector<2x32xf32> -> vector<2x32xf32>
      %25 = arith.addf %22, %24 : vector<2x32xf32>
      %26 = math.tanh %25 : vector<2x32xf32>
      %27 = arith.addi %7, %arg6 : i32
      %28 = vector.broadcast %27 : i32 to vector<2x1xi32>
      %29 = arith.cmpi slt, %28, %5 : vector<2x1xi32>
      %30 = arith.extui %29 : vector<2x1xi1> to vector<2x1xi32>
      %31 = arith.sitofp %30 : vector<2x1xi32> to vector<2x1xf32>
      %32 = vector.broadcast %31 : vector<2x1xf32> to vector<2x32xf32>
      %33 = arith.mulf %26, %32 : vector<2x32xf32>
      %34 = arith.index_cast %arg6 : i32 to index
      %c0_18 = arith.constant 0 : index
      %c0_19 = arith.constant 0 : index
      %35 = vector.load %arg4[%34, %c0_18, %c0_19] : memref<8x2x32xf32, #tpu.memory_space<vmem>>, vector<1x2x32xf32>
      %36 = vector.shape_cast %35 : vector<1x2x32xf32> to vector<2x32xf32>
      %37 = vector.shape_cast %33 : vector<2x32xf32> to vector<1x2x32xf32>
      tpu.vector_store %arg4[%34, %c0_18, %c0_19], %37 {strides = array<i32>} : memref<8x2x32xf32, #tpu.memory_space<vmem>>, vector<1x2x32xf32>,
      scf.yield %26 : vector<2x32xf32>
    }
    %c0_13 = arith.constant 0 : index
    %c0_14 = arith.constant 0 : index
    %19 = vector.load %arg5[%c0_13, %c0_14] : memref<2x32xf32, #tpu.memory_space<vmem>>, vector<2x32xf32>
    tpu.vector_store %arg5[%c0_13, %c0_14], %18 {strides = array<i32>} : memref<2x32xf32, #tpu.memory_space<vmem>>, vector<2x32xf32>,
    return
  }
  func.func @transform_0(%arg0: i32) -> (i32, i32, i32) {
    %c0_i32 = arith.constant 0 : i32
    %c0_i32_0 = arith.constant 0 : i32
    %c0_i32_1 = arith.constant 0 : i32
    return %arg0, %c0_i32, %c0_i32_0 : i32, i32, i32
  }
  func.func @transform_1(%arg0: i32) -> (i32, i32) {
    %c0_i32 = arith.constant 0 : i32
    %c0_i32_0 = arith.constant 0 : i32
    %c0_i32_1 = arith.constant 0 : i32
    return %c0_i32, %c0_i32_0 : i32, i32
  }
  func.func @transform_2(%arg0: i32) -> (i32, i32) {
    %c0_i32 = arith.constant 0 : i32
    %c0_i32_0 = arith.constant 0 : i32
    %c0_i32_1 = arith.constant 0 : i32
    return %c0_i32, %c0_i32_0 : i32, i32
  }
  func.func @transform_3(%arg0: i32) -> (i32, i32, i32) {
    %c0_i32 = arith.constant 0 : i32
    %c0_i32_0 = arith.constant 0 : i32
    %c0_i32_1 = arith.constant 0 : i32
    return %arg0, %c0_i32, %c0_i32_0 : i32, i32, i32
  }
}

</mosaic_0001>

<llo_original>
// kernel: tpu_custom_call.1
$region0: #{tpu_custom_call.1}
  #allocation0 [shape = 'u32[]', space=smem, size = 0x4, offset = 0x4, fixed_abs, tag = 'smem constant byte address 0x4 - core index']
  #allocation1 [shape = 'u32[144,128]{1,0:T(1,128)}', space=vmem, size = 0x12000, scoped, tag = 'internal scratch']
  #allocation2 [shape = 'f32[2,32]{1,0:T(2,128)}', space=vmem, size = 0x400, scoped, tag = 'scratch operand']
  %s0 = inlined_call_operand.hbm [shape: f32[8,2,32], index: 0, kind: input, shape index: {}]
  %s1 = inlined_call_operand.hbm [shape: bf16[32,32], index: 1, kind: input, shape index: {}]
  %s2 = inlined_call_operand.vmem [shape: s32[2,1], index: 2, kind: input, shape index: {}]
  %s3 = inlined_call_operand.hbm [shape: f32[8,2,32], index: 3, kind: output, shape index: {}]
  %s4 = sld [smem:[#allocation0]]
  $region41: #{tpu_custom_call.1} parent=0
    _
  %s6 = ssub.s32 1, %s4
  %s7 = scalar_select 0, %s6, %s4
  $region1: #{tpu_custom_call.1} parent=0
    #allocation3 [shape = 'u8[8192]{0}', space=vmem, size = 0x2000, scoped, tag = 'input window, operand 0, single buffered']
    #allocation4 [shape = 's32[1]{0}', space=sflag, size = 0x4, scoped, tag = 'scoped memory for tpu_custom_call.1']
    #allocation5 [shape = 's32[1]{0}', space=sflag, size = 0x4, scoped, tag = 'scoped memory for tpu_custom_call.1']
    #allocation6 [shape = 'u8[8192]{0}', space=vmem, size = 0x2000, scoped, tag = 'input window, operand 1, single buffered']
    #allocation7 [shape = 's32[1]{0}', space=sflag, size = 0x4, scoped, tag = 'scoped memory for tpu_custom_call.1']
    #allocation8 [shape = 'u8[8192]{0}', space=vmem, size = 0x2000, scoped, tag = 'output window, operand 0, single buffered']
    %8 = vsyncpa [#allocation4], 0
    %9 = vsyncpa [#allocation7], 0
    %10 = vsyncpa [#allocation5], 0
    // Predicated region
    $region2: #{tpu_custom_call.1} parent=1 // pred_check
      _
    $region3: #{tpu_custom_call.1} parent=1 // pred_check_branch
      %12 = sbr.rel (0) target = $region5
    $region4: #{tpu_custom_call.1} parent=1 // pred_region
      %s14 = ssub.s32 256, 256
      %15 = vsyncadd [#allocation4], %s14
      %s16 = sshll.u32 [#allocation3], 4
      %s17 = int_to_ptr.vmem [resolvable:$true] %s16
      %22 = dma.hbm_to_vmem [thread:$0]  %s0, 256, %s17, [#allocation4], 32, 32, 2
    $region5: #{tpu_custom_call.1} parent=1 // pred_fallthru
      _
    // Predicated region
    $region6: #{tpu_custom_call.1} parent=1 // pred_check
      _
    $region7: #{tpu_custom_call.1} parent=1 // pred_check_branch
      %24 = sbr.rel (0) target = $region9
    $region8: #{tpu_custom_call.1} parent=1 // pred_region
      %s26 = ssub.s32 256, 256
      %27 = vsyncadd [#allocation7], %s26
      %s28 = sshll.u32 [#allocation6], 4
      %s29 = int_to_ptr.vmem [resolvable:$true] %s28
      %34 = dma.hbm_to_vmem [thread:$0]  %s1, 256, %s29, [#allocation7], 64, 64, 4
    $region9: #{tpu_custom_call.1} parent=1 // pred_fallthru
      _
    // Predicated region
    $region10: #{tpu_custom_call.1} parent=1 // pred_check
      _
    $region11: #{tpu_custom_call.1} parent=1 // pred_check_branch
      %36 = sbr.rel (0) target = $region13
    $region12: #{tpu_custom_call.1} parent=1 // pred_region
      _
    $region13: #{tpu_custom_call.1} parent=1 // pred_fallthru
      _
    // Predicated region
    $region14: #{tpu_custom_call.1} parent=1 // pred_check
      _
    $region15: #{tpu_custom_call.1} parent=1 // pred_check_branch
      %38 = sbr.rel (0) target = $region17
    $region16: #{tpu_custom_call.1} parent=1 // pred_region
      %39 = dma.done [#allocation4], 256
    $region17: #{tpu_custom_call.1} parent=1 // pred_fallthru
      _
    // Predicated region
    $region18: #{tpu_custom_call.1} parent=1 // pred_check
      _
    $region19: #{tpu_custom_call.1} parent=1 // pred_check_branch
      %41 = sbr.rel (0) target = $region21
    $region20: #{tpu_custom_call.1} parent=1 // pred_region
      %42 = dma.done [#allocation7], 256
    $region21: #{tpu_custom_call.1} parent=1 // pred_fallthru
      _
    %p44 = scmp.eq.s32.totalorder 0, 0
    // Predicated region
    $region22: #{tpu_custom_call.1} parent=1 // pred_check
      %p45 = pneg %p44
    $region23: #{tpu_custom_call.1} parent=1 // pred_check_branch
      %47 = sbr.rel (%p45) target = $region25
    $region24: #{tpu_custom_call.1} parent=1 // pred_region
      %vm48 = vcmask 254976
      %49 = vst.msk [vmem:[#allocation2] sm:$0x3] %vm48, 0.0
    $region25: #{tpu_custom_call.1} parent=1 // pred_fallthru
      _
    %vm50 = vcmask 254976
    %51 = vst.msk [vmem:[#allocation8] sm:$0x3] %vm50, 0.0
    %52 = vst.msk [vmem:[#allocation8 + $0x2] sm:$0x3] %vm50, 0.0
    %53 = vst.msk [vmem:[#allocation8 + $0x4] sm:$0x3] %vm50, 0.0
    %54 = vst.msk [vmem:[#allocation8 + $0x6] sm:$0x3] %vm50, 0.0
    %55 = vst.msk [vmem:[#allocation8 + $0x8] sm:$0x3] %vm50, 0.0
    %56 = vst.msk [vmem:[#allocation8 + $0xa] sm:$0x3] %vm50, 0.0
    %57 = vst.msk [vmem:[#allocation8 + $0xc] sm:$0x3] %vm50, 0.0
    %58 = vst.msk [vmem:[#allocation8 + $0xe] sm:$0x3] %vm50, 0.0
    %v59 = vld [vmem:[%s2] sm:$0x3]
    %v60 = vld [vmem:[#allocation6] sm:$0xf]
    %v61 = vld [vmem:[#allocation6 + $0x4] sm:$0xf]
    %v62 = vld [vmem:[#allocation6 + $0x8] sm:$0xf]
    %v63 = vld [vmem:[#allocation6 + $0xc] sm:$0xf]
    %s64 = smul.u32 0, 8
    %vm65 = vcmask 1024
    %v66 = vsel %vm65, %v59, 2147483648
    %v67 = vand.u32 %v66, 65535
    %v68 = vshra.s32 %v66, 16
    %v69 = vcvt.s32.f32 %v67
    %v70 = vcvt.s32.f32 %v68
    %71 = vmax.xlane.f32.xlu0 %v70
    %v72 = vpop.xlane.xlu0 %71
    %vm73 = vcmp.eq.f32.partialorder %v70, %v72
    %v74 = vsel %vm73, %v69, -inf
    %75 = vmax.xlane.f32.xlu0 %v74
    %v76 = vpop.xlane.xlu0 %75
    %v77 = vcvt.f32.s32 %v76
    %v78 = vcvt.f32.s32 %v72
    %v79 = vshll.u32 %v78, 16
    %v80 = vadd.s32 %v79, %v77
    %v81 = vrot.slane %v80, 4
    %vm82 = vcmp.gt.s32.totalorder %v80, %v81
    %v83 = vsel %vm82, %v80, %v81
    %v84 = vrot.slane %v83, 2
    %vm85 = vcmp.gt.s32.totalorder %v83, %v84
    %v86 = vsel %vm85, %v83, %v84
    %v87 = vrot.slane %v86, 1
    %vm88 = vcmp.gt.s32.totalorder %v86, %v87
    %v89 = vsel %vm88, %v86, %v87
    %s90 = vtos %v89
    %s91 = ssub.s32 %s90, %s64
    %p92 = scmp.gt.s32.totalorder %s91, 0
    %s93 = scalar_select %p92, %s91, 0
    %p94 = scmp.lt.s32.totalorder %s93, 8
    %s95 = scalar_select %p94, %s93, 8
    %v96 = vld [vmem:[#allocation2] sm:$0x3]
    // While loop
    $region26: #{tpu_custom_call.1} parent=1 // loop_pre_header
      _
    $region27: #{tpu_custom_call.1} parent=1 // loop_header
      %s98 = sphi 0, %s100
      %p99 = scmp.ge.s32.totalorder %s98, %s95
      %v103 = vphi %v96, %v165
    $region28: #{tpu_custom_call.1} parent=1 // loop_header_branch
      %102 = sbr.rel (%p99) target = $region32
    $region29: #{tpu_custom_call.1} parent=1 // loop_body
      %s104 = smul.u32 %s98, 2
      %s105 = scalar_lea.vmem [#allocation3], %s104
      %v106 = vld [vmem:[%s105] sm:$0x3]
      %v107 = vpack.c.bf16 %v103, %v103
      %v112 = vunpack.c.l.b16 %v60
      %v113 = vunpack.c.l.b16 %v61
      %v114 = vunpack.c.l.b16 %v62
      %v115 = vunpack.c.l.b16 %v63
      %v116 = vpack.c.b16 %v113, %v112
      %v117 = vpack.c.b16 %v115, %v114
      %vm120 = vcmask 261120
      %v122 = vsel %vm120, %v107, 0
      %124 = vmatprep.subr.bf16.mxu0 0
      %125 = vmatpush1.bf16.msra.mxu0 0
      %126 = vmatprep.subr.bf16.mxu0 0
      %127 = vmatpush1.bf16.msra.mxu0 0
      %128 = vmatprep.subr.bf16.mxu0 0
      %129 = vmatpush1.bf16.msra.mxu0 0
      %130 = vmatprep.subr.bf16.mxu0 0
      %131 = vmatpush1.bf16.msra.mxu0 0
      %132 = vmatprep.subr.bf16.mxu0 0
      %133 = vmatpush1.bf16.msra.mxu0 0
      %134 = vmatprep.subr.bf16.mxu0 0
      %135 = vmatpush1.bf16.msra.mxu0 0
      %136 = vmatprep.subr.bf16.mxu0 0
      %137 = vmatpush1.bf16.msra.mxu0 %v117
      %138 = vmatprep.subr.bf16.mxu0 0
      %139 = vmatpush1.bf16.msra.mxu0 %v116
      %140 = vmatprep.subr.bf16.mxu0 0
      %141 = vmatpush2.bf16.msra.mxu0 0
      %142 = vmatprep.subr.bf16.mxu0 0
      %143 = vmatpush2.bf16.msra.mxu0 0
      %144 = vmatprep.subr.bf16.mxu0 0
      %145 = vmatpush2.bf16.msra.mxu0 0
      %146 = vmatprep.subr.bf16.mxu0 0
      %147 = vmatpush2.bf16.msra.mxu0 0
      %148 = vmatprep.subr.bf16.mxu0 0
      %149 = vmatpush2.bf16.msra.mxu0 0
      %150 = vmatprep.subr.bf16.mxu0 0
      %151 = vmatpush2.bf16.msra.mxu0 0
      %152 = vmatprep.subr.bf16.mxu0 0
      %153 = vmatpush2.bf16.msra.mxu0 0
      %154 = vmatprep.subr.bf16.mxu0 0
      %155 = vmatpush2.bf16.msra.mxu0 0
      %156 = vmatprep.mubr.bf16.mxu0 0
      %157 = vmatmul.mubr.bf16.gmra.mxu0 %v122
      %v158 = vpop.f32.mrf.mxu0
      %v159 = vadd.f32 0.0, %v158
      %v160 = vpop.f32.mrf.mxu0
      %v161 = vpop.f32.mrf.mxu0
      %v162 = vpop.f32.mrf.mxu0
      %163 = vdwg.mxu0
      %v164 = vadd.f32 %v106, %v159
      %v165 = vtanh.pop %v164
      %s166 = sadd.s32 %s64, %s98
      %v167 = vstv %s166
      %vm168 = vcmp.lt.s32.totalorder %v167, %v59
      %v169 = vsel %vm168, 1, 0
      %v170 = vcvt.s32.f32 %v169
      %172 = vset.pattern.permute.xlu0 0
      %173 = vperm.xlu0 %172, %v170
      %v174 = vpop.permute.xlu0 %173
      %v176 = vmul.f32 %v165, %v174
      %s177 = scalar_lea.vmem [#allocation8], %s104
      %178 = vst.msk [vmem:[%s177] sm:$0x3] %vm50, %v176
    $region30: #{tpu_custom_call.1} parent=1 // loop_footer
      %s100 = sadd.s32 %s98, 1
    $region31: #{tpu_custom_call.1} parent=1 // loop_footer_branch
      %97 = sbr.rel target = $region27
    $region32: #{tpu_custom_call.1} parent=1 // loop_exit
      _
    %179 = vst.msk [vmem:[#allocation2] sm:$0x3] %vm50, %v103
    // Predicated region
    $region33: #{tpu_custom_call.1} parent=1 // pred_check
      _
    $region34: #{tpu_custom_call.1} parent=1 // pred_check_branch
      %181 = sbr.rel (0) target = $region36
    $region35: #{tpu_custom_call.1} parent=1 // pred_region
      %s183 = ssub.s32 256, 256
      %184 = vsyncadd [#allocation5], %s183
      %s185 = sshll.u32 [#allocation8], 4
      %s186 = int_to_ptr.vmem [resolvable:$true] %s185
      %191 = dma.vmem_to_hbm [thread:$0]  %s186, 256, %s3, [#allocation5], 32, 32, 2
    $region36: #{tpu_custom_call.1} parent=1 // pred_fallthru
      _
    // Predicated region
    $region37: #{tpu_custom_call.1} parent=1 // pred_check
      _
    $region38: #{tpu_custom_call.1} parent=1 // pred_check_branch
      %193 = sbr.rel (0) target = $region40
    $region39: #{tpu_custom_call.1} parent=1 // pred_region
      %194 = dma.done [#allocation5], 256
    $region40: #{tpu_custom_call.1} parent=1 // pred_fallthru
      _
    %195 = vsyncpa [#allocation4], 1
    %196 = vsyncpa [#allocation7], 1
    %197 = vsyncpa [#allocation5], 1

</llo_original>
